<compile_context>
chip_gen: v6e
topology: v6e:2x2x1
jax: 0.10.0
libtpu: 0.0.40
codegen_flags: <defaults>
</compile_context>

<pallas_src>
import functools

import jax
import jax.numpy as jnp
import numpy as np
from jax.experimental import pallas as pl
from jax.experimental.pallas import tpu as pltpu


def _sae_kernel(x_ref, we_ref, be_ref, wd_ref, bd_ref,
                acts_ref, xhat_ref, sse_ref, abs_ref,
                *, inner_tiles, tile_n, valid_hw, needs_mask):
    # grid = (B, S, inner_tiles); axes 0/1 are "parallel", axis 2 ("arbitrary")
    # carries this (b, s) pair's resident loss-partial accumulators.
    t = pl.program_id(2)

    @pl.when(t == 0)
    def _():
        sse_ref[...] = jnp.zeros_like(sse_ref)
        abs_ref[...] = jnp.zeros_like(abs_ref)

    x = x_ref[0]                                           # (C, TN), bf16

    # encode: 1x1 conv == channel matmul; MXU with f32 accumulation.
    z = jnp.dot(we_ref[...], x, preferred_element_type=jnp.float32) + be_ref[...]
    acts = jnp.maximum(z, 0.0)                             # (Ch, TN) f32 (2nd ReLU is a no-op)
    acts_io = acts.astype(acts_ref.dtype)
    acts_ref[0] = acts_io                                  # lane-dense store

    # decode: wd has a ones row appended in the wrapper, so the last row of
    # `dec` is sum_Ch(acts) (the L1 partial) computed on the MXU instead of a
    # cross-sublane VPU/XLU reduction over the big hidden dim.  acts >= 0, so
    # no abs() pass is needed.
    dec = jnp.dot(wd_ref[...], acts_io,
                  preferred_element_type=jnp.float32) + bd_ref[...]   # (C+1, TN)
    xhat = dec[:-1]                                        # (C, TN) f32
    abs_row = dec[-1:]                                     # (1, TN) f32
    xhat_ref[0] = xhat.astype(xhat_ref.dtype)

    # recon partial: reduce only over the small channel (sublane) axis here;
    # the cross-lane reduce to a scalar happens once in the wrapper.
    diff = xhat - x.astype(jnp.float32)                    # x upcast at point of use
    sse_row = jnp.sum(diff * diff, axis=0, keepdims=True)  # (1, TN)

    if needs_mask:
        # Mask spatial padding out of the loss partials (xhat of zero-padded
        # columns is wd@relu(be)+bd != 0, so it must not leak into the sse).
        s = pl.program_id(1)
        col0 = (s * inner_tiles + t) * tile_n
        lane = jax.lax.broadcasted_iota(jnp.int32, (1, tile_n), 1)
        maskf = ((col0 + lane) < valid_hw).astype(jnp.float32)
        sse_row = sse_row * maskf
        abs_row = abs_row * maskf

    sse_ref[0] += sse_row
    abs_ref[0] += abs_row


def conv_sae_forward(x_nchw, w_enc, b_enc, w_dec, b_dec,
                     l1_coeff=1e-5, current_l1_coeff=None,
                     tile_n=None, io_dtype=jnp.bfloat16):
    """Mirror of ConvSAE.forward -> (l1_loss, recon_loss, acts, x_hat).

    acts / x_hat stream through HBM in `io_dtype` (bf16 by default; pass
    jnp.float32 for exact f32 streaming).  Matmuls accumulate in f32 and all
    bias/ReLU/loss math is f32, so losses differ from a pure-f32 PyTorch run
    only by the bf16 quantization of the streamed tensors (~1e-2 relative).
    """
    if current_l1_coeff is None:
        current_l1_coeff = l1_coeff

    B, C, H, W = x_nchw.shape
    Ch = w_enc.shape[0]                    # hidden_channels; w_enc is (Ch, C, 1, 1)
    HW = H * W
    HW_pad = ((HW + 127) // 128) * 128     # lane-dense stores even for ragged H*W
    io_bytes = jnp.dtype(io_dtype).itemsize

    # ---- per-generation VMEM budget -> tile size --------------------------
    try:
        vmem_cap = int(pltpu.get_tpu_info().vmem_capacity_bytes)
    except Exception:                      # no TPU info available: be conservative (v7x-sized)
        vmem_cap = 64 * 1024 * 1024
    # ~78% of physical VMEM as the Mosaic scoped limit (~100 MiB on v5e/v6e,
    # ~50 MiB on v7x); size tiles against ~55% of physical so the pipeline's
    # double-buffers + Mosaic internal scratch always fit under that limit.
    vmem_limit = max(16 * 1024 * 1024, int(0.78 * vmem_cap))
    tile_budget = int(0.55 * vmem_cap)

    def _footprint(tn):
        # Per-grid-step VMEM footprint, including the f32 in-kernel temporaries.
        stream = 2 * (2 * C + Ch) * tn * io_bytes          # x / xhat / acts tiles, 2x buffered
        f32_tmp = (Ch + 3 * C + 3) * tn * 4                # z/acts, dec, diff, x_f32, partial rows
        io_tmp = Ch * tn * io_bytes                        # acts_io temporary
        partials = 2 * 2 * tn * 4                          # sse/abs partial blocks
        weights = 2 * (Ch * C + (C + 1) * Ch) * io_bytes + 2 * (Ch + C + 1) * 4
        return stream + f32_tmp + io_tmp + partials + weights

    if tile_n is None:
        # Largest 128-multiple divisor of HW_pad whose footprint fits the budget.
        cands = [d for d in range(HW_pad, 127, -128) if HW_pad % d == 0]
        tile_n = cands[-1]                                 # 128 fallback (may exceed budget for huge Ch)
        for d in cands:                                    # descending
            if _footprint(d) <= tile_budget:
                tile_n = d
                break
    assert HW_pad % tile_n == 0 and tile_n % 128 == 0
    num_tiles = HW_pad // tile_n

    # Split the tile axis across an outer "parallel" axis so v7x's two
    # TensorCores stay busy even when B is small/odd.  Each (b, split) pair
    # accumulates into its own loss-partial block; halves are summed below.
    S = 2 if (num_tiles >= 2 and num_tiles % 2 == 0) else 1
    inner_tiles = num_tiles // S

    # channel-major: pure reshapes, no NCHW<->NHWC transposes in HBM.
    x3d = x_nchw.reshape(B, C, HW)
    if HW_pad != HW:
        x3d = jnp.pad(x3d, ((0, 0), (0, 0), (0, HW_pad - HW)))
    x3d = x3d.astype(io_dtype)
    # TODO(synk): for C < 16 (bf16) the x/xhat tiles waste sublanes; fixing it
    # needs a channel-major (C, B*HW) transpose in HBM, which costs more than it
    # saves at these shapes.

    we = w_enc.reshape(Ch, C).astype(io_dtype)                                  # (Ch, C)
    wd_aug = jnp.concatenate([w_dec.reshape(C, Ch).astype(jnp.float32),
                              jnp.ones((1, Ch), jnp.float32)],
                             axis=0).astype(io_dtype)                           # (C+1, Ch)
    be = b_enc.reshape(Ch, 1).astype(jnp.float32)
    bd_aug = jnp.concatenate([b_dec.reshape(C, 1).astype(jnp.float32),
                              jnp.zeros((1, 1), jnp.float32)], axis=0)          # (C+1, 1)

    kernel = functools.partial(_sae_kernel, inner_tiles=inner_tiles,
                               tile_n=tile_n, valid_hw=HW,
                               needs_mask=(HW_pad != HW))

    grid = (B, S, inner_tiles)
    acts3d, xhat3d, sse_part, abs_part = pl.pallas_call(
        kernel,
        out_shape=(
            jax.ShapeDtypeStruct((B, Ch, HW_pad), io_dtype),
            jax.ShapeDtypeStruct((B, C, HW_pad), io_dtype),
            jax.ShapeDtypeStruct((B * S, 1, tile_n), jnp.float32),
            jax.ShapeDtypeStruct((B * S, 1, tile_n), jnp.float32),
        ),
        grid_spec=pltpu.PrefetchScalarGridSpec(
            num_scalar_prefetch=0,
            grid=grid,
            in_specs=[
                pl.BlockSpec((1, C, tile_n),
                             lambda b, s, t, T=inner_tiles: (b, 0, s * T + t)),
                # Constant-index weight/bias blocks: only DMA'd once.
                # TODO(synk): single-buffer these (pl.Buffered(1)) or stage them
                # once into VMEM scratch via make_async_copy for very wide SAEs
                # on v7x; their 2x buffers are already counted in _footprint.
                pl.BlockSpec((Ch, C), lambda b, s, t: (0, 0)),
                pl.BlockSpec((Ch, 1), lambda b, s, t: (0, 0)),
                pl.BlockSpec((C + 1, Ch), lambda b, s, t: (0, 0)),
                pl.BlockSpec((C + 1, 1), lambda b, s, t: (0, 0)),
            ],
            out_specs=[
                pl.BlockSpec((1, Ch, tile_n),
                             lambda b, s, t, T=inner_tiles: (b, 0, s * T + t)),
                pl.BlockSpec((1, C, tile_n),
                             lambda b, s, t, T=inner_tiles: (b, 0, s * T + t)),
                pl.BlockSpec((1, 1, tile_n),
                             lambda b, s, t, S_=S: (b * S_ + s, 0, 0)),
                pl.BlockSpec((1, 1, tile_n),
                             lambda b, s, t, S_=S: (b * S_ + s, 0, 0)),
            ],
        ),
        compiler_params=pltpu.CompilerParams(
            dimension_semantics=("parallel", "parallel", "arbitrary"),
            vmem_limit_bytes=vmem_limit),
    )(x3d, we, be, wd_aug, bd_aug)

    # Finish the means in f32 in the wrapper (tiny cross-lane reduce).
    N = B * HW
    recon_loss = jnp.sum(sse_part) / (N * C)                      # F.mse_loss 'mean'
    l1_loss = (jnp.sum(abs_part) / (N * Ch)) * current_l1_coeff   # acts.abs().mean() * coeff

    if HW_pad != HW:
        acts3d = acts3d[:, :, :HW]
        xhat3d = xhat3d[:, :, :HW]
    acts = acts3d.reshape(B, Ch, H, W)     # already NCHW: pure reshape
    x_hat = xhat3d.reshape(B, C, H, W)
    return l1_loss, recon_loss, acts, x_hat


def _kaiming_uniform(key, out_ch, in_ch):
    # PyTorch kaiming_uniform_(nonlinearity='relu'): bound = sqrt(2)*sqrt(3/fan_in)
    bound = np.sqrt(2.0) * np.sqrt(3.0 / in_ch)
    return jax.random.uniform(key, (out_ch, in_ch, 1, 1),
                              minval=-bound, maxval=bound, dtype=jnp.float32)


def _conv_bias(key, out_ch, in_ch):
    # PyTorch Conv2d default bias init: U(-1/sqrt(fan_in), 1/sqrt(fan_in))
    bound = 1.0 / np.sqrt(in_ch)
    return jax.random.uniform(key, (out_ch,), minval=-bound, maxval=bound,
                              dtype=jnp.float32)


def _check_case(key, B, C, H, W, HIDDEN, L1):
    kx, kwe, kbe, kwd, kbd = jax.random.split(key, 5)
    x = jax.random.normal(kx, (B, C, H, W), dtype=jnp.float32)
    w_enc = _kaiming_uniform(kwe, HIDDEN, C)
    b_enc = _conv_bias(kbe, HIDDEN, C)
    w_dec = _kaiming_uniform(kwd, C, HIDDEN)
    b_dec = _conv_bias(kbd, C, HIDDEN)

    l1_loss, recon_loss, acts, x_hat = conv_sae_forward(
        x, w_enc, b_enc, w_dec, b_dec, l1_coeff=L1)
    jax.block_until_ready((l1_loss, recon_loss, acts, x_hat))

    # pure-JAX reference mirroring the kernel's bf16 streaming / f32 math
    io = jnp.bfloat16
    xq = x.astype(io).astype(jnp.float32)
    weq = w_enc.reshape(HIDDEN, C).astype(io).astype(jnp.float32)
    wdq = w_dec.reshape(C, HIDDEN).astype(io).astype(jnp.float32)
    z_ref = jnp.einsum("oc,bchw->bohw", weq, xq) + b_enc[None, :, None, None]
    acts_f32 = jnp.maximum(z_ref, 0.0)
    acts_q = acts_f32.astype(io).astype(jnp.float32)
    xh_f32 = jnp.einsum("co,bohw->bchw", wdq, acts_q) + b_dec[None, :, None, None]
    recon_ref = jnp.mean((xh_f32 - xq) ** 2)
    l1_ref = jnp.mean(acts_q) * L1         # acts >= 0, so abs() is a no-op

    assert acts.shape == (B, HIDDEN, H, W) and x_hat.shape == (B, C, H, W)
    np.testing.assert_allclose(np.asarray(acts.astype(jnp.float32)),
                               np.asarray(acts_q), rtol=2e-2, atol=2e-2)
    np.testing.assert_allclose(np.asarray(x_hat.astype(jnp.float32)),
                               np.asarray(xh_f32.astype(io).astype(jnp.float32)),
                               rtol=2e-2, atol=2e-2)
    np.testing.assert_allclose(float(recon_loss), float(recon_ref),
                               rtol=5e-3, atol=1e-6)
    np.testing.assert_allclose(float(l1_loss), float(l1_ref),
                               rtol=5e-3, atol=1e-9)


if __name__ == "__main__":
    key = jax.random.PRNGKey(0)
    k1, k2 = jax.random.split(key)
    # primary shape (HW = 256, lane-aligned)
    _check_case(k1, B=2, C=4, H=16, W=16, HIDDEN=32, L1=1e-5)
    # ragged spatial size (HW = 196 -> padded to 256; padded lanes masked out of the losses)
    _check_case(k2, B=2, C=4, H=14, W=14, HIDDEN=32, L1=1e-5)
    print("KERNEL_OK")
</pallas_src>

<mosaic_0001>
module attributes {stable_mosaic.version = 11 : i64} {
  func.func @_sae_kernel(%arg0: i32, %arg1: i32, %arg2: i32, %arg3: memref<1x4x256xbf16, #tpu.memory_space<vmem>>, %arg4: memref<32x4xbf16, #tpu.memory_space<vmem>>, %arg5: memref<32x1xf32, #tpu.memory_space<vmem>>, %arg6: memref<5x32xbf16, #tpu.memory_space<vmem>>, %arg7: memref<5x1xf32, #tpu.memory_space<vmem>>, %arg8: memref<1x32x256xbf16, #tpu.memory_space<vmem>>, %arg9: memref<1x4x256xbf16, #tpu.memory_space<vmem>>, %arg10: memref<1x1x256xf32, #tpu.memory_space<vmem>>, %arg11: memref<1x1x256xf32, #tpu.memory_space<vmem>>) attributes {dimension_semantics = [#tpu.dimension_semantics<parallel>, #tpu.dimension_semantics<parallel>, #tpu.dimension_semantics<arbitrary>], iteration_bounds = array<i64: 2, 1, 1>, scalar_prefetch = 0 : i64, scratch_operands = 0 : i64, tpu.core_type = #tpu.core_type<tc>, window_params = [{transform_indices = @transform_0, window_bounds = array<i64: 1, 4, 256>}, {pipeline_mode = #tpu.pipeline_mode<synchronous>, transform_indices = @transform_1, window_bounds = array<i64: 32, 4>}, {pipeline_mode = #tpu.pipeline_mode<synchronous>, transform_indices = @transform_2, window_bounds = array<i64: 32, 1>}, {pipeline_mode = #tpu.pipeline_mode<synchronous>, transform_indices = @transform_3, window_bounds = array<i64: 5, 32>}, {pipeline_mode = #tpu.pipeline_mode<synchronous>, transform_indices = @transform_4, window_bounds = array<i64: 5, 1>}, {transform_indices = @transform_5, window_bounds = array<i64: 1, 32, 256>}, {transform_indices = @transform_6, window_bounds = array<i64: 1, 4, 256>}, {transform_indices = @transform_7, window_bounds = array<i64: 1, 1, 256>}, {transform_indices = @transform_8, window_bounds = array<i64: 1, 1, 256>}]} {
    %c0_i32 = arith.constant 0 : i32
    %0 = arith.cmpi eq, %arg2, %c0_i32 : i32
    %1 = arith.extui %0 : i1 to i32
    %c0_i32_0 = arith.constant 0 : i32
    %2 = arith.cmpi ne, %1, %c0_i32_0 : i32
    scf.if %2 {
      %cst_32 = arith.constant 0.000000e+00 : f32
      %44 = vector.broadcast %cst_32 : f32 to vector<1x1x256xf32>
      %c0_33 = arith.constant 0 : index
      %c0_34 = arith.constant 0 : index
      %c0_35 = arith.constant 0 : index
      %45 = vector.load %arg10[%c0_33, %c0_34, %c0_35] : memref<1x1x256xf32, #tpu.memory_space<vmem>>, vector<1x1x256xf32>
      tpu.vector_store %arg10[%c0_33, %c0_34, %c0_35], %44 {strides = array<i32>} : memref<1x1x256xf32, #tpu.memory_space<vmem>>, vector<1x1x256xf32>,
      %cst_36 = arith.constant 0.000000e+00 : f32
      %46 = vector.broadcast %cst_36 : f32 to vector<1x1x256xf32>
      %c0_37 = arith.constant 0 : index
      %c0_38 = arith.constant 0 : index
      %c0_39 = arith.constant 0 : index
      %47 = vector.load %arg11[%c0_37, %c0_38, %c0_39] : memref<1x1x256xf32, #tpu.memory_space<vmem>>, vector<1x1x256xf32>
      tpu.vector_store %arg11[%c0_37, %c0_38, %c0_39], %46 {strides = array<i32>} : memref<1x1x256xf32, #tpu.memory_space<vmem>>, vector<1x1x256xf32>,
    } else {
    }
    %c0 = arith.constant 0 : index
    %c0_1 = arith.constant 0 : index
    %c0_2 = arith.constant 0 : index
    %3 = vector.load %arg3[%c0, %c0_1, %c0_2] : memref<1x4x256xbf16, #tpu.memory_space<vmem>>, vector<1x4x256xbf16>
    %4 = vector.shape_cast %3 : vector<1x4x256xbf16> to vector<4x256xbf16>
    %c0_3 = arith.constant 0 : index
    %c0_4 = arith.constant 0 : index
    %5 = vector.load %arg4[%c0_3, %c0_4] : memref<32x4xbf16, #tpu.memory_space<vmem>>, vector<32x4xbf16>
    %cst = arith.constant dense<0.000000e+00> : vector<32x256xf32>
    %6 = tpu.matmul %5, %4, %cst {dimension_numbers = #tpu.dot_dimension_numbers<[1], [0], [0], [1], [0, 0, 1, 1], [], []>} : vector<32x4xbf16>, vector<4x256xbf16>, vector<32x256xf32> -> vector<32x256xf32>
    %c0_5 = arith.constant 0 : index
    %c0_6 = arith.constant 0 : index
    %7 = vector.load %arg5[%c0_5, %c0_6] : memref<32x1xf32, #tpu.memory_space<vmem>>, vector<32x1xf32>
    %8 = vector.broadcast %7 : vector<32x1xf32> to vector<32x256xf32>
    %9 = arith.addf %6, %8 : vector<32x256xf32>
    %cst_7 = arith.constant 0.000000e+00 : f32
    %10 = vector.broadcast %cst_7 : f32 to vector<32x256xf32>
    %11 = arith.maximumf %9, %10 : vector<32x256xf32>
    %12 = arith.truncf %11 : vector<32x256xf32> to vector<32x256xbf16>
    %c0_8 = arith.constant 0 : index
    %c0_9 = arith.constant 0 : index
    %c0_10 = arith.constant 0 : index
    %13 = vector.load %arg8[%c0_8, %c0_9, %c0_10] : memref<1x32x256xbf16, #tpu.memory_space<vmem>>, vector<1x32x256xbf16>
    %14 = vector.shape_cast %13 : vector<1x32x256xbf16> to vector<32x256xbf16>
    %15 = vector.shape_cast %12 : vector<32x256xbf16> to vector<1x32x256xbf16>
    tpu.vector_store %arg8[%c0_8, %c0_9, %c0_10], %15 {strides = array<i32>} : memref<1x32x256xbf16, #tpu.memory_space<vmem>>, vector<1x32x256xbf16>,
    %c0_11 = arith.constant 0 : index
    %c0_12 = arith.constant 0 : index
    %16 = vector.load %arg6[%c0_11, %c0_12] : memref<5x32xbf16, #tpu.memory_space<vmem>>, vector<5x32xbf16>
    %cst_13 = arith.constant dense<0.000000e+00> : vector<5x256xf32>
    %17 = tpu.matmul %16, %12, %cst_13 {dimension_numbers = #tpu.dot_dimension_numbers<[1], [0], [0], [1], [0, 0, 1, 1], [], []>} : vector<5x32xbf16>, vector<32x256xbf16>, vector<5x256xf32> -> vector<5x256xf32>
    %c0_14 = arith.constant 0 : index
    %c0_15 = arith.constant 0 : index
    %18 = vector.load %arg7[%c0_14, %c0_15] : memref<5x1xf32, #tpu.memory_space<vmem>>, vector<5x1xf32>
    %19 = vector.broadcast %18 : vector<5x1xf32> to vector<5x256xf32>
    %20 = arith.addf %17, %19 : vector<5x256xf32>
    %21 = vector.extract_strided_slice %20 {offsets = [0, 0], sizes = [4, 256], strides = [1, 1]} : vector<5x256xf32> to vector<4x256xf32>
    %22 = vector.extract_strided_slice %20 {offsets = [4, 0], sizes = [1, 256], strides = [1, 1]} : vector<5x256xf32> to vector<1x256xf32>
    %23 = arith.truncf %21 : vector<4x256xf32> to vector<4x256xbf16>
    %c0_16 = arith.constant 0 : index
    %c0_17 = arith.constant 0 : index
    %c0_18 = arith.constant 0 : index
    %24 = vector.load %arg9[%c0_16, %c0_17, %c0_18] : memref<1x4x256xbf16, #tpu.memory_space<vmem>>, vector<1x4x256xbf16>
    %25 = vector.shape_cast %24 : vector<1x4x256xbf16> to vector<4x256xbf16>
    %26 = vector.shape_cast %23 : vector<4x256xbf16> to vector<1x4x256xbf16>
    tpu.vector_store %arg9[%c0_16, %c0_17, %c0_18], %26 {strides = array<i32>} : memref<1x4x256xbf16, #tpu.memory_space<vmem>>, vector<1x4x256xbf16>,
    %27 = arith.extf %4 : vector<4x256xbf16> to vector<4x256xf32>
    %28 = arith.subf %21, %27 : vector<4x256xf32>
    %29 = arith.mulf %28, %28 : vector<4x256xf32>
    %cst_19 = arith.constant dense<0.000000e+00> : vector<256xf32>
    %30 = vector.multi_reduction <add>, %29, %cst_19 [0] : vector<4x256xf32> to vector<256xf32>
    %31 = vector.shape_cast %30 : vector<256xf32> to vector<1x256xf32>
    %c0_20 = arith.constant 0 : index
    %c0_21 = arith.constant 0 : index
    %c0_22 = arith.constant 0 : index
    %32 = vector.load %arg10[%c0_20, %c0_21, %c0_22] : memref<1x1x256xf32, #tpu.memory_space<vmem>>, vector<1x1x256xf32>
    %33 = vector.shape_cast %32 : vector<1x1x256xf32> to vector<1x256xf32>
    %34 = arith.addf %33, %31 : vector<1x256xf32>
    %c0_23 = arith.constant 0 : index
    %c0_24 = arith.constant 0 : index
    %c0_25 = arith.constant 0 : index
    %35 = vector.load %arg10[%c0_23, %c0_24, %c0_25] : memref<1x1x256xf32, #tpu.memory_space<vmem>>, vector<1x1x256xf32>
    %36 = vector.shape_cast %35 : vector<1x1x256xf32> to vector<1x256xf32>
    %37 = vector.shape_cast %34 : vector<1x256xf32> to vector<1x1x256xf32>
    tpu.vector_store %arg10[%c0_23, %c0_24, %c0_25], %37 {strides = array<i32>} : memref<1x1x256xf32, #tpu.memory_space<vmem>>, vector<1x1x256xf32>,
    %c0_26 = arith.constant 0 : index
    %c0_27 = arith.constant 0 : index
    %c0_28 = arith.constant 0 : index
    %38 = vector.load %arg11[%c0_26, %c0_27, %c0_28] : memref<1x1x256xf32, #tpu.memory_space<vmem>>, vector<1x1x256xf32>
    %39 = vector.shape_cast %38 : vector<1x1x256xf32> to vector<1x256xf32>
    %40 = arith.addf %39, %22 : vector<1x256xf32>
    %c0_29 = arith.constant 0 : index
    %c0_30 = arith.constant 0 : index
    %c0_31 = arith.constant 0 : index
    %41 = vector.load %arg11[%c0_29, %c0_30, %c0_31] : memref<1x1x256xf32, #tpu.memory_space<vmem>>, vector<1x1x256xf32>
    %42 = vector.shape_cast %41 : vector<1x1x256xf32> to vector<1x256xf32>
    %43 = vector.shape_cast %40 : vector<1x256xf32> to vector<1x1x256xf32>
    tpu.vector_store %arg11[%c0_29, %c0_30, %c0_31], %43 {strides = array<i32>} : memref<1x1x256xf32, #tpu.memory_space<vmem>>, vector<1x1x256xf32>,
    return
  }
  func.func @transform_0(%arg0: i32, %arg1: i32, %arg2: i32) -> (i32, i32, i32) {
    %c1_i32 = arith.constant 1 : i32
    %0 = arith.muli %arg1, %c1_i32 : i32
    %1 = arith.addi %0, %arg2 : i32
    %c0_i32 = arith.constant 0 : i32
    %c0_i32_0 = arith.constant 0 : i32
    return %arg0, %c0_i32, %1 : i32, i32, i32
  }
  func.func @transform_1(%arg0: i32, %arg1: i32, %arg2: i32) -> (i32, i32) {
    %c0_i32 = arith.constant 0 : i32
    %c0_i32_0 = arith.constant 0 : i32
    %c0_i32_1 = arith.constant 0 : i32
    return %c0_i32, %c0_i32_0 : i32, i32
  }
  func.func @transform_2(%arg0: i32, %arg1: i32, %arg2: i32) -> (i32, i32) {
    %c0_i32 = arith.constant 0 : i32
    %c0_i32_0 = arith.constant 0 : i32
    %c0_i32_1 = arith.constant 0 : i32
    return %c0_i32, %c0_i32_0 : i32, i32
  }
  func.func @transform_3(%arg0: i32, %arg1: i32, %arg2: i32) -> (i32, i32) {
    %c0_i32 = arith.constant 0 : i32
    %c0_i32_0 = arith.constant 0 : i32
    %c0_i32_1 = arith.constant 0 : i32
    return %c0_i32, %c0_i32_0 : i32, i32
  }
  func.func @transform_4(%arg0: i32, %arg1: i32, %arg2: i32) -> (i32, i32) {
    %c0_i32 = arith.constant 0 : i32
    %c0_i32_0 = arith.constant 0 : i32
    %c0_i32_1 = arith.constant 0 : i32
    return %c0_i32, %c0_i32_0 : i32, i32
  }
  func.func @transform_5(%arg0: i32, %arg1: i32, %arg2: i32) -> (i32, i32, i32) {
    %c1_i32 = arith.constant 1 : i32
    %0 = arith.muli %arg1, %c1_i32 : i32
    %1 = arith.addi %0, %arg2 : i32
    %c0_i32 = arith.constant 0 : i32
    %c0_i32_0 = arith.constant 0 : i32
    return %arg0, %c0_i32, %1 : i32, i32, i32
  }
  func.func @transform_6(%arg0: i32, %arg1: i32, %arg2: i32) -> (i32, i32, i32) {
    %c1_i32 = arith.constant 1 : i32
    %0 = arith.muli %arg1, %c1_i32 : i32
    %1 = arith.addi %0, %arg2 : i32
    %c0_i32 = arith.constant 0 : i32
    %c0_i32_0 = arith.constant 0 : i32
    return %arg0, %c0_i32, %1 : i32, i32, i32
  }
  func.func @transform_7(%arg0: i32, %arg1: i32, %arg2: i32) -> (i32, i32, i32) {
    %c1_i32 = arith.constant 1 : i32
    %0 = arith.muli %arg0, %c1_i32 : i32
    %1 = arith.addi %0, %arg1 : i32
    %c0_i32 = arith.constant 0 : i32
    %c0_i32_0 = arith.constant 0 : i32
    %c0_i32_1 = arith.constant 0 : i32
    return %1, %c0_i32, %c0_i32_0 : i32, i32, i32
  }
  func.func @transform_8(%arg0: i32, %arg1: i32, %arg2: i32) -> (i32, i32, i32) {
    %c1_i32 = arith.constant 1 : i32
    %0 = arith.muli %arg0, %c1_i32 : i32
    %1 = arith.addi %0, %arg1 : i32
    %c0_i32 = arith.constant 0 : i32
    %c0_i32_0 = arith.constant 0 : i32
    %c0_i32_1 = arith.constant 0 : i32
    return %1, %c0_i32, %c0_i32_0 : i32, i32, i32
  }
}

</mosaic_0001>

<llo_original>
// kernel: tpu_custom_call.1
$region0: #{tpu_custom_call.1}
  #allocation0 [shape = 'u32[]', space=smem, size = 0x4, offset = 0x4, fixed_abs, tag = 'smem constant byte address 0x4 - core index']
  #allocation1 [shape = 'u32[144,128]{1,0:T(1,128)}', space=vmem, size = 0x12000, scoped, tag = 'internal scratch']
  %s0 = inlined_call_operand.vmem [shape: bf16[2,4,256], index: 0, kind: input, shape index: {}]
  %s1 = inlined_call_operand.vmem [shape: bf16[32,4], index: 1, kind: input, shape index: {}]
  %s2 = inlined_call_operand.vmem [shape: f32[32,1], index: 2, kind: input, shape index: {}]
  %s3 = inlined_call_operand.vmem [shape: bf16[5,32], index: 3, kind: input, shape index: {}]
  %s4 = inlined_call_operand.vmem [shape: f32[5,1], index: 4, kind: input, shape index: {}]
  %s5 = inlined_call_operand.hbm [shape: bf16[2,32,256], index: 5, kind: output, shape index: {0}]
  %s6 = inlined_call_operand.hbm [shape: bf16[2,4,256], index: 6, kind: output, shape index: {1}]
  %s7 = inlined_call_operand.hbm [shape: f32[2,1,256], index: 7, kind: output, shape index: {2}]
  %s8 = inlined_call_operand.hbm [shape: f32[2,1,256], index: 8, kind: output, shape index: {3}]
  %9 = xla_tuple %s5, %s6, %s7, %s8
  %s10 = sld [smem:[#allocation0]]
  $region81: #{tpu_custom_call.1} parent=0
    _
  %s12 = ssub.s32 1, %s10
  %s13 = scalar_select 0, %s12, %s10
  $region1: #{tpu_custom_call.1} parent=0
    #allocation2 [shape = 'u8[32768]{0}', space=vmem, size = 0x8000, scoped, tag = 'output window, operand 0']
    #allocation3 [shape = 's32[2]{0}', space=sflag, size = 0x8, scoped, tag = 'scoped memory for tpu_custom_call.1']
    #allocation4 [shape = 'u8[4096]{0}', space=vmem, size = 0x1000, scoped, tag = 'output window, operand 1']
    #allocation5 [shape = 's32[2]{0}', space=sflag, size = 0x8, scoped, tag = 'scoped memory for tpu_custom_call.1']
    #allocation6 [shape = 'u8[2048]{0}', space=vmem, size = 0x800, scoped, tag = 'output window, operand 2']
    #allocation7 [shape = 'u8[2048]{0}', space=vmem, size = 0x800, scoped, tag = 'output window, operand 3']
    #allocation8 [shape = 's32[2]{0}', space=sflag, size = 0x8, scoped, tag = 'scoped memory for tpu_custom_call.1']
    %14 = vsyncpa [#allocation3], 0
    %s15 = scalar_lea.sflag [#allocation3], 1
    %16 = vsyncpa %s15, 0
    %17 = vsyncpa [#allocation5], 0
    %s18 = scalar_lea.sflag [#allocation5], 1
    %19 = vsyncpa %s18, 0
    %20 = vsyncpa [#allocation8], 0
    %s21 = scalar_lea.sflag [#allocation8], 1
    %22 = vsyncpa %s21, 0
    loop: start=0, step=1, limit=4
    $region2: #{tpu_custom_call.1} parent=1 // loop_pre_header
      _
    $region3: #{tpu_custom_call.1} parent=1 // loop_header
      %s24 = sphi 0, %s28
      %p25 = scmp.ge.s32.totalorder %s24, 4
      %s31 = sphi 0, %s50
      %s32 = sphi 0, %s46
      %s33 = sphi 0, %s42
      %s34 = sphi 0, %s31
      %s35 = sphi 0, %s32
      %s36 = sphi 0, %s33
      %s37 = sphi 0, %s34
      %s38 = sphi 0, %s35
      %s39 = sphi 0, %s36
      %s57 = sphi 0, %s59
      %s60 = sphi 0, %s57
      %s61 = sphi 0, %s60
      %s77 = sphi 0, %s61
      %s81 = sphi 0, %s81
      %s83 = sphi 0, %s81
      %s84 = sphi 0, %s83
      %s98 = sphi 0, %s84
      %s102 = sphi 0, %s102
      %s104 = sphi 0, %s102
      %s105 = sphi 0, %s104
      %s119 = sphi 0, %s105
      %s123 = sphi 0, %s123
      %s125 = sphi 0, %s123
      %s126 = sphi 0, %s125
      %s140 = sphi 0, %s126
      %s144 = sphi 0, %s144
      %s146 = sphi 0, %s144
      %s147 = sphi 0, %s146
      %s161 = sphi 0, %s147
      %s171 = sphi 0, %s173
      %s174 = sphi 0, %s171
      %s175 = sphi 0, %s174
      %s191 = sphi 0, %s175
      %s201 = sphi 0, %s203
      %s204 = sphi 0, %s201
      %s205 = sphi 0, %s204
      %s221 = sphi 0, %s205
      %s229 = sphi 0, %s231
      %s232 = sphi 0, %s229
      %s233 = sphi 0, %s232
      %s249 = sphi 0, %s233
      %s257 = sphi 0, %s259
      %s260 = sphi 0, %s257
      %s261 = sphi 0, %s260
      %s277 = sphi 0, %s261
    $region4: #{tpu_custom_call.1} parent=1 // loop_header_branch
      %27 = sbr.rel (%p25) target = $region8
    $region5: #{tpu_custom_call.1} parent=1 // loop_body
      %s29 = ssub.s32 %s24, 1
      %s30 = ssub.s32 %s24, 2
      %s40 = sadd.s32 1, %s33
      %p41 = scmp.ge.s32.totalorder %s40, 1
      %s42 = scalar_select %p41, 0, %s40
      %s43 = sadd.s32 1, %s32
      %s44 = scalar_select %p41, %s43, %s32
      %p45 = scmp.ge.s32.totalorder %s44, 1
      %s46 = scalar_select %p45, 0, %s44
      %s47 = sadd.s32 1, %s31
      %s48 = scalar_select %p45, %s47, %s31
      %p49 = scmp.ge.s32.totalorder %s48, 2
      %s50 = scalar_select %p49, 0, %s48
      %s51 = sadd.s32 %s32, %s33
      %s52 = sadd.s32 %s46, %s42
      %s53 = ssub.s32 %s31, %s50
      %s54 = ssub.s32 %s51, %s52
      %s55 = sor.u32 %s53, %s54
      %p56 = scmp.eq.s32.totalorder %s55, 0
      %s58 = sadd.s32 %s57, 1
      %s59 = scalar_select %p56, %s57, %s58
      %p62 = pneg %p56
      %p63 = scmp.eq.s32.totalorder %s24, 1
      %p64 = por %p62, %p63
      %p65 = scmp.ne.s32.totalorder %s57, %s60
      %p66 = scmp.eq.s32.totalorder %s24, 0
      %p67 = por %p65, %p66
      %p68 = scmp.ne.s32.totalorder %s57, %s60
      %p69 = scmp.eq.s32.totalorder %s29, 1
      %p70 = por %p68, %p69
      %p71 = scmp.ne.s32.totalorder %s60, %s61
      %p72 = scmp.eq.s32.totalorder %s29, 0
      %p73 = por %p71, %p72
      %p74 = scmp.ne.s32.totalorder %s60, %s61
      %p75 = scmp.eq.s32.totalorder %s30, 1
      %p76 = por %p74, %p75
      %p78 = scmp.ne.s32.totalorder %s61, %s77
      %p79 = scmp.eq.s32.totalorder %s30, 0
      %p80 = por %p78, %p79
      %s82 = sadd.s32 %s81, 1
      %p85 = scmp.eq.s32.totalorder %s24, 1
      %p86 = scmp.ne.s32.totalorder %s81, %s83
      %p87 = scmp.eq.s32.totalorder %s24, 0
      %p88 = por %p86, %p87
      %p89 = scmp.ne.s32.totalorder %s81, %s83
      %p90 = scmp.eq.s32.totalorder %s29, 1
      %p91 = por %p89, %p90
      %p92 = scmp.ne.s32.totalorder %s83, %s84
      %p93 = scmp.eq.s32.totalorder %s29, 0
      %p94 = por %p92, %p93
      %p95 = scmp.ne.s32.totalorder %s83, %s84
      %p96 = scmp.eq.s32.totalorder %s30, 1
      %p97 = por %p95, %p96
      %p99 = scmp.ne.s32.totalorder %s84, %s98
      %p100 = scmp.eq.s32.totalorder %s30, 0
      %p101 = por %p99, %p100
      %s103 = sadd.s32 %s102, 1
      %p106 = scmp.eq.s32.totalorder %s24, 1
      %p107 = scmp.ne.s32.totalorder %s102, %s104
      %p108 = scmp.eq.s32.totalorder %s24, 0
      %p109 = por %p107, %p108
      %p110 = scmp.ne.s32.totalorder %s102, %s104
      %p111 = scmp.eq.s32.totalorder %s29, 1
      %p112 = por %p110, %p111
      %p113 = scmp.ne.s32.totalorder %s104, %s105
      %p114 = scmp.eq.s32.totalorder %s29, 0
      %p115 = por %p113, %p114
      %p116 = scmp.ne.s32.totalorder %s104, %s105
      %p117 = scmp.eq.s32.totalorder %s30, 1
      %p118 = por %p116, %p117
      %p120 = scmp.ne.s32.totalorder %s105, %s119
      %p121 = scmp.eq.s32.totalorder %s30, 0
      %p122 = por %p120, %p121
      %s124 = sadd.s32 %s123, 1
      %p127 = scmp.eq.s32.totalorder %s24, 1
      %p128 = scmp.ne.s32.totalorder %s123, %s125
      %p129 = scmp.eq.s32.totalorder %s24, 0
      %p130 = por %p128, %p129
      %p131 = scmp.ne.s32.totalorder %s123, %s125
      %p132 = scmp.eq.s32.totalorder %s29, 1
      %p133 = por %p131, %p132
      %p134 = scmp.ne.s32.totalorder %s125, %s126
      %p135 = scmp.eq.s32.totalorder %s29, 0
      %p136 = por %p134, %p135
      %p137 = scmp.ne.s32.totalorder %s125, %s126
      %p138 = scmp.eq.s32.totalorder %s30, 1
      %p139 = por %p137, %p138
      %p141 = scmp.ne.s32.totalorder %s126, %s140
      %p142 = scmp.eq.s32.totalorder %s30, 0
      %p143 = por %p141, %p142
      %s145 = sadd.s32 %s144, 1
      %p148 = scmp.eq.s32.totalorder %s24, 1
      %p149 = scmp.ne.s32.totalorder %s144, %s146
      %p150 = scmp.eq.s32.totalorder %s24, 0
      %p151 = por %p149, %p150
      %p152 = scmp.ne.s32.totalorder %s144, %s146
      %p153 = scmp.eq.s32.totalorder %s29, 1
      %p154 = por %p152, %p153
      %p155 = scmp.ne.s32.totalorder %s146, %s147
      %p156 = scmp.eq.s32.totalorder %s29, 0
      %p157 = por %p155, %p156
      %p158 = scmp.ne.s32.totalorder %s146, %s147
      %p159 = scmp.eq.s32.totalorder %s30, 1
      %p160 = por %p158, %p159
      %p162 = scmp.ne.s32.totalorder %s147, %s161
      %p163 = scmp.eq.s32.totalorder %s30, 0
      %p164 = por %p162, %p163
      %s165 = sadd.s32 %s32, %s33
      %s166 = sadd.s32 %s46, %s42
      %s167 = ssub.s32 %s31, %s50
      %s168 = ssub.s32 %s165, %s166
      %s169 = sor.u32 %s167, %s168
      %p170 = scmp.eq.s32.totalorder %s169, 0
      %s172 = sadd.s32 %s171, 1
      %s173 = scalar_select %p170, %s171, %s172
      %p176 = pneg %p170
      %p177 = scmp.eq.s32.totalorder %s24, 1
      %p178 = por %p176, %p177
      %p179 = scmp.ne.s32.totalorder %s171, %s174
      %p180 = scmp.eq.s32.totalorder %s24, 0
      %p181 = por %p179, %p180
      %p182 = scmp.ne.s32.totalorder %s171, %s174
      %p183 = scmp.eq.s32.totalorder %s29, 1
      %p184 = por %p182, %p183
      %p185 = scmp.ne.s32.totalorder %s174, %s175
      %p186 = scmp.eq.s32.totalorder %s29, 0
      %p187 = por %p185, %p186
      %p188 = scmp.ne.s32.totalorder %s174, %s175
      %p189 = scmp.eq.s32.totalorder %s30, 1
      %p190 = por %p188, %p189
      %p192 = scmp.ne.s32.totalorder %s175, %s191
      %p193 = scmp.eq.s32.totalorder %s30, 0
      %p194 = por %p192, %p193
      %s195 = sadd.s32 %s32, %s33
      %s196 = sadd.s32 %s46, %s42
      %s197 = ssub.s32 %s31, %s50
      %s198 = ssub.s32 %s195, %s196
      %s199 = sor.u32 %s197, %s198
      %p200 = scmp.eq.s32.totalorder %s199, 0
      %s202 = sadd.s32 %s201, 1
      %s203 = scalar_select %p200, %s201, %s202
      %p206 = pneg %p200
      %p207 = scmp.eq.s32.totalorder %s24, 1
      %p208 = por %p206, %p207
      %p209 = scmp.ne.s32.totalorder %s201, %s204
      %p210 = scmp.eq.s32.totalorder %s24, 0
      %p211 = por %p209, %p210
      %p212 = scmp.ne.s32.totalorder %s201, %s204
      %p213 = scmp.eq.s32.totalorder %s29, 1
      %p214 = por %p212, %p213
      %p215 = scmp.ne.s32.totalorder %s204, %s205
      %p216 = scmp.eq.s32.totalorder %s29, 0
      %p217 = por %p215, %p216
      %p218 = scmp.ne.s32.totalorder %s204, %s205
      %p219 = scmp.eq.s32.totalorder %s30, 1
      %p220 = por %p218, %p219
      %p222 = scmp.ne.s32.totalorder %s205, %s221
      %p223 = scmp.eq.s32.totalorder %s30, 0
      %p224 = por %p222, %p223
      %s225 = sadd.s32 %s31, %s32
      %s226 = sadd.s32 %s50, %s46
      %s227 = ssub.s32 %s225, %s226
      %p228 = scmp.eq.s32.totalorder %s227, 0
      %s230 = sadd.s32 %s229, 1
      %s231 = scalar_select %p228, %s229, %s230
      %p234 = pneg %p228
      %p235 = scmp.eq.s32.totalorder %s24, 1
      %p236 = por %p234, %p235
      %p237 = scmp.ne.s32.totalorder %s229, %s232
      %p238 = scmp.eq.s32.totalorder %s24, 0
      %p239 = por %p237, %p238
      %p240 = scmp.ne.s32.totalorder %s229, %s232
      %p241 = scmp.eq.s32.totalorder %s29, 1
      %p242 = por %p240, %p241
      %p243 = scmp.ne.s32.totalorder %s232, %s233
      %p244 = scmp.eq.s32.totalorder %s29, 0
      %p245 = por %p243, %p244
      %p246 = scmp.ne.s32.totalorder %s232, %s233
      %p247 = scmp.eq.s32.totalorder %s30, 1
      %p248 = por %p246, %p247
      %p250 = scmp.ne.s32.totalorder %s233, %s249
      %p251 = scmp.eq.s32.totalorder %s30, 0
      %p252 = por %p250, %p251
      %s253 = sadd.s32 %s31, %s32
      %s254 = sadd.s32 %s50, %s46
      %s255 = ssub.s32 %s253, %s254
      %p256 = scmp.eq.s32.totalorder %s255, 0
      %s258 = sadd.s32 %s257, 1
      %s259 = scalar_select %p256, %s257, %s258
      %p262 = pneg %p256
      %p263 = scmp.eq.s32.totalorder %s24, 1
      %p264 = por %p262, %p263
      %p265 = scmp.ne.s32.totalorder %s257, %s260
      %p266 = scmp.eq.s32.totalorder %s24, 0
      %p267 = por %p265, %p266
      %p268 = scmp.ne.s32.totalorder %s257, %s260
      %p269 = scmp.eq.s32.totalorder %s29, 1
      %p270 = por %p268, %p269
      %p271 = scmp.ne.s32.totalorder %s260, %s261
      %p272 = scmp.eq.s32.totalorder %s29, 0
      %p273 = por %p271, %p272
      %p274 = scmp.ne.s32.totalorder %s260, %s261
      %p275 = scmp.eq.s32.totalorder %s30, 1
      %p276 = por %p274, %p275
      %p278 = scmp.ne.s32.totalorder %s261, %s277
      %p279 = scmp.eq.s32.totalorder %s30, 0
      %p280 = por %p278, %p279
      %p281 = scmp.le.s32.totalorder 1, %s24
      %p282 = scmp.lt.s32.totalorder %s24, 3
      %p283 = pnand %p281, %p282
      %p284 = pneg %p283
      // Predicated region
      $region9: #{tpu_custom_call.1} parent=5 // pred_check
        _
      $region10: #{tpu_custom_call.1} parent=5 // pred_check_branch
        %286 = sbr.rel (%p283) target = $region12
      $region11: #{tpu_custom_call.1} parent=5 // pred_region
        %s287 = ssub.s32 %s24, 1
        // Predicated region
        $region13: #{tpu_custom_call.1} parent=11 // pred_check
          %p288 = pneg %p94
        $region14: #{tpu_custom_call.1} parent=11 // pred_check_branch
          %290 = sbr.rel (%p288) target = $region16
        $region15: #{tpu_custom_call.1} parent=11 // pred_region
          _
        $region16: #{tpu_custom_call.1} parent=11 // pred_fallthru
          _
        // Predicated region
        $region17: #{tpu_custom_call.1} parent=11 // pred_check
          %p291 = pneg %p115
        $region18: #{tpu_custom_call.1} parent=11 // pred_check_branch
          %293 = sbr.rel (%p291) target = $region20
        $region19: #{tpu_custom_call.1} parent=11 // pred_region
          _
        $region20: #{tpu_custom_call.1} parent=11 // pred_fallthru
          _
        // Predicated region
        $region21: #{tpu_custom_call.1} parent=11 // pred_check
          %p294 = pneg %p136
        $region22: #{tpu_custom_call.1} parent=11 // pred_check_branch
          %296 = sbr.rel (%p294) target = $region24
        $region23: #{tpu_custom_call.1} parent=11 // pred_region
          _
        $region24: #{tpu_custom_call.1} parent=11 // pred_fallthru
          _
        // Predicated region
        $region25: #{tpu_custom_call.1} parent=11 // pred_check
          %p297 = pneg %p157
        $region26: #{tpu_custom_call.1} parent=11 // pred_check_branch
          %299 = sbr.rel (%p297) target = $region28
        $region27: #{tpu_custom_call.1} parent=11 // pred_region
          _
        $region28: #{tpu_custom_call.1} parent=11 // pred_fallthru
          _
      $region12: #{tpu_custom_call.1} parent=5 // pred_fallthru
        _
      %p300 = scmp.lt.s32.totalorder %s24, 2
      // Predicated region
      $region29: #{tpu_custom_call.1} parent=5 // pred_check
        %p301 = pneg %p300
      $region30: #{tpu_custom_call.1} parent=5 // pred_check_branch
        %303 = sbr.rel (%p301) target = $region32
      $region31: #{tpu_custom_call.1} parent=5 // pred_region
        // Predicated region
        $region33: #{tpu_custom_call.1} parent=31 // pred_check
          %p304 = pneg %p67
        $region34: #{tpu_custom_call.1} parent=31 // pred_check_branch
          %306 = sbr.rel (%p304) target = $region36
        $region35: #{tpu_custom_call.1} parent=31 // pred_region
          %s307 = sadd.s32 %s32, %s33
          %s308 = smul.u32 2, %s307
          %p309 = scmp.lt.s32.totalorder %s31, 1
          %s310 = scalar_select %p309, %s31, 1
          %p311 = scmp.lt.s32.totalorder %s308, 1
          %s312 = scalar_select %p311, %s308, 1
          %s313 = smul.addr %s310, 2
          %s314 = sadd.s32 %s312, %s313
          %s315 = smul.addr %s314, 2
          %s316 = scalar_lea.vmem %s0, %s315
          %s317 = sadd.s32 %s32, %s33
          %s318 = smul.u32 2, %s317
        $region36: #{tpu_custom_call.1} parent=31 // pred_fallthru
          _
      $region32: #{tpu_custom_call.1} parent=5 // pred_fallthru
        _
      %p319 = scmp.le.s32.totalorder 1, %s24
      %p320 = scmp.lt.s32.totalorder %s24, 3
      %p321 = pnand %p319, %p320
      %p322 = pneg %p321
      // Predicated region
      $region37: #{tpu_custom_call.1} parent=5 // pred_check
        _
      $region38: #{tpu_custom_call.1} parent=5 // pred_check_branch
        %324 = sbr.rel (%p321) target = $region40
      $region39: #{tpu_custom_call.1} parent=5 // pred_region
        %s325 = ssub.s32 %s24, 1
        %s326 = sadd.s32 %s35, %s36
        %s327 = smul.u32 2, %s326
        %p328 = scmp.lt.s32.totalorder %s34, 1
        %s329 = scalar_select %p328, %s34, 1
        %p330 = scmp.lt.s32.totalorder %s327, 1
        %s331 = scalar_select %p330, %s327, 1
        %s332 = smul.addr %s329, 2
        %s333 = sadd.s32 %s331, %s332
        %s334 = smul.addr %s333, 2
        %s335 = scalar_lea.vmem %s0, %s334
        %p336 = pneg %p73
        %p337 = pneg %p70
        %p338 = pneg %p94
        %p339 = pneg %p91
        %p340 = pneg %p115
        %p341 = pneg %p112
        %p342 = pneg %p136
        %p343 = pneg %p133
        %p344 = pneg %p157
        %p345 = pneg %p154
        %p346 = pneg %p187
        %p347 = pneg %p184
        %s348 = sand.u32 %s174, 1
        %s349 = scalar_lea.sflag [#allocation3], %s348
        %s350 = sand.u32 %s174, 1
        %s351 = smul.addr %s350, 32
        %s352 = scalar_lea.vmem [#allocation2], %s351
        %p353 = pneg %p217
        %p354 = pneg %p214
        %s355 = sand.u32 %s29, 1
        %s356 = scalar_lea.sflag [#allocation5], %s355
        %s357 = sand.u32 %s204, 1
        %s358 = smul.addr %s357, 4
        %s359 = scalar_lea.vmem [#allocation4], %s358
        %p360 = pneg %p245
        %p361 = pneg %p242
        %s362 = sand.u32 %s29, 1
        %s363 = scalar_lea.sflag [#allocation5], %s362
        %s364 = sand.u32 %s232, 1
        %s365 = smul.addr %s364, 2
        %s366 = scalar_lea.vmem [#allocation6], %s365
        %p367 = pneg %p273
        %p368 = pneg %p270
        %s369 = sand.u32 %s260, 1
        %s370 = scalar_lea.sflag [#allocation8], %s369
        %s371 = sand.u32 %s260, 1
        %s372 = smul.addr %s371, 2
        %s373 = scalar_lea.vmem [#allocation7], %s372
        %s374 = sadd.s32 %s35, %s36
        %s375 = smul.u32 2, %s374
        %p376 = scmp.lt.s32.totalorder %s34, 1
        %s377 = scalar_select %p376, %s34, 1
        %p378 = scmp.lt.s32.totalorder %s375, 1
        %s379 = scalar_select %p378, %s375, 1
        %s380 = smul.addr %s377, 2
        %s381 = sadd.s32 %s379, %s380
        %s382 = smul.addr %s381, 2
        %s383 = scalar_lea.vmem %s0, %s382
        %s384 = sadd.s32 %s35, %s36
        %s385 = smul.u32 2, %s384
        %s386 = sadd.s32 %s35, %s36
        %s387 = smul.u32 2, %s386
        %s388 = sadd.s32 %s35, %s36
        %s389 = smul.u32 2, %s388
        %s390 = sadd.s32 %s34, %s35
        %s391 = sadd.s32 %s34, %s35
        %p393 = scmp.eq.s32.totalorder %s36, 0
        // Predicated region
        $region41: #{tpu_custom_call.1} parent=39 // pred_check
          %p394 = pneg %p393
        $region42: #{tpu_custom_call.1} parent=39 // pred_check_branch
          %396 = sbr.rel (%p394) target = $region44
        $region43: #{tpu_custom_call.1} parent=39 // pred_region
          %v397 = vlaneseq
          %vm398 = vcmp.ge.s32.totalorder %v397, 0
          %vm399 = vcmp.lt.s32.totalorder %v397, 256
          %vm400 = vmand %vm398, %vm399
          %401 = vst.msk [vmem:[%s366] sm:$0x3] %vm400, 0.0
          %402 = vst.msk [vmem:[%s373] sm:$0x3] %vm400, 0.0
        $region44: #{tpu_custom_call.1} parent=39 // pred_fallthru
          _
        %v403 = vld [vmem:[%s383] sm:$0xf]
        %v404 = vld [vmem:[%s1] sm:$0xf]
        %v405 = vld [vmem:[%s1 + $0x4] sm:$0xf]
        %v406 = vld [vmem:[%s1 + $0x8] sm:$0xf]
        %v407 = vld [vmem:[%s1 + $0xc] sm:$0xf]
        %v408 = vld [vmem:[%s2] sm:$0xff]
        %v409 = vld [vmem:[%s2 + $0x8] sm:$0xff]
        %v410 = vld [vmem:[%s2 + $0x10] sm:$0xff]
        %v411 = vld [vmem:[%s2 + $0x18] sm:$0xff]
        %413 = vset.pattern.permute.xlu0 0
        %414 = vperm.xlu0 %413, %v408
        %v415 = vpop.permute.xlu0 %414
        %418 = vset.pattern.permute.xlu0 0
        %419 = vperm.xlu0 %418, %v409
        %v420 = vpop.permute.xlu0 %419
        %423 = vset.pattern.permute.xlu0 0
        %424 = vperm.xlu0 %423, %v410
        %v425 = vpop.permute.xlu0 %424
        %428 = vset.pattern.permute.xlu0 0
        %429 = vperm.xlu0 %428, %v411
        %v430 = vpop.permute.xlu0 %429
        %v436 = vunpack.c.l.b16 %v404
        %v437 = vunpack.c.l.b16 %v405
        %v438 = vunpack.c.l.b16 %v406
        %v439 = vunpack.c.l.b16 %v407
        %v440 = vpack.c.b16 %v437, %v436
        %v441 = vpack.c.b16 %v439, %v438
        %v444 = vunpack.c.l.s4 1983009808
        %v445 = vunpack.c.0.s8 %v444
        %v446 = vlaneseq
        %v447 = vshrl.u32 %v446, 7
        %v448 = vsub.s32 %v445, %v447
        %v449 = vrot.slane %v403, %v448
        %v450 = vcombine.high %v449, %v449
        %vm451 = vcmask 31744
        %v453 = vsel %vm451, %v440, 0
        %v456 = vsel %vm451, %v441, 0
        %vm458 = vcmask 1041408
        %v460 = vsel %vm458, %v449, 0
        %v463 = vsel %vm458, %v450, 0
        %465 = vmatprep.subr.bf16.mxu0 0
        %466 = vmatpush1.bf16.msra.mxu0 0
        %467 = vmatprep.subr.bf16.mxu0 0
        %468 = vmatpush1.bf16.msra.mxu0 0
        %469 = vmatprep.subr.bf16.mxu0 0
        %470 = vmatpush1.bf16.msra.mxu0 0
        %471 = vmatprep.subr.bf16.mxu0 0
        %472 = vmatpush1.bf16.msra.mxu0 0
        %473 = vmatprep.subr.bf16.mxu0 0
        %474 = vmatpush1.bf16.msra.mxu0 0
        %475 = vmatprep.subr.bf16.mxu0 0
        %476 = vmatpush1.bf16.msra.mxu0 0
        %477 = vmatprep.subr.bf16.mxu0 0
        %478 = vmatpush1.bf16.msra.mxu0 0
        %479 = vmatprep.subr.bf16.mxu0 %v463
        %480 = vmatpush1.bf16.msra.mxu0 %v460
        %481 = vmatprep.subr.bf16.mxu0 0
        %482 = vmatpush2.bf16.msra.mxu0 0
        %483 = vmatprep.subr.bf16.mxu0 0
        %484 = vmatpush2.bf16.msra.mxu0 0
        %485 = vmatprep.subr.bf16.mxu0 0
        %486 = vmatpush2.bf16.msra.mxu0 0
        %487 = vmatprep.subr.bf16.mxu0 0
        %488 = vmatpush2.bf16.msra.mxu0 0
        %489 = vmatprep.subr.bf16.mxu0 0
        %490 = vmatpush2.bf16.msra.mxu0 0
        %491 = vmatprep.subr.bf16.mxu0 0
        %492 = vmatpush2.bf16.msra.mxu0 0
        %493 = vmatprep.subr.bf16.mxu0 0
        %494 = vmatpush2.bf16.msra.mxu0 0
        %495 = vmatprep.subr.bf16.mxu0 0
        %496 = vmatpush2.bf16.msra.mxu0 0
        %497 = vmatprep.mubr.bf16.mxu0 0
        %498 = vmatmul.mubr.bf16.gmra.mxu0 %v453
        %v499 = vpop.f32.mrf.mxu0
        %v500 = vadd.f32 %v415, %v499
        %v501 = vpop.f32.mrf.mxu0
        %v502 = vadd.f32 %v415, %v501
        %v503 = vpop.f32.mrf.mxu0
        %v504 = vadd.f32 %v420, %v503
        %v505 = vpop.f32.mrf.mxu0
        %v506 = vadd.f32 %v420, %v505
        %507 = vmatprep.mubr.bf16.mxu0 0
        %508 = vmatmul.mubr.bf16.gmra.mxu0 %v456
        %v509 = vpop.f32.mrf.mxu0
        %v510 = vadd.f32 %v425, %v509
        %v511 = vpop.f32.mrf.mxu0
        %v512 = vadd.f32 %v425, %v511
        %v513 = vpop.f32.mrf.mxu0
        %v514 = vadd.f32 %v430, %v513
        %v515 = vpop.f32.mrf.mxu0
        %v516 = vadd.f32 %v430, %v515
        %517 = vdwg.mxu0
        %v518 = vmax.f32 %v500, 0.0
        %v519 = vmax.f32 %v502, 0.0
        %v520 = vmax.f32 %v504, 0.0
        %v521 = vmax.f32 %v506, 0.0
        %v522 = vmax.f32 %v510, 0.0
        %v523 = vmax.f32 %v512, 0.0
        %v524 = vmax.f32 %v514, 0.0
        %v525 = vmax.f32 %v516, 0.0
        %v526 = vpack.c.bf16 %v520, %v518
        %v527 = vpack.c.bf16 %v521, %v519
        %v528 = vpack.c.bf16 %v524, %v522
        %v529 = vpack.c.bf16 %v525, %v523
        %v534 = vunpack.c.l.b16 %v526
        %v535 = vunpack.c.l.b16 %v527
        %v536 = vunpack.c.h.b16 %v526
        %v537 = vunpack.c.h.b16 %v527
        %v538 = vunpack.c.l.b16 %v528
        %v539 = vunpack.c.l.b16 %v529
        %v540 = vunpack.c.h.b16 %v528
        %v541 = vunpack.c.h.b16 %v529
        %v542 = vpack.c.b16 %v535, %v534
        %v543 = vpack.c.b16 %v537, %v536
        %v544 = vpack.c.b16 %v539, %v538
        %v545 = vpack.c.b16 %v541, %v540
        %550 = vst [vmem:[%s352] sm:$0xff] %v542
        %551 = vst [vmem:[%s352 + $0x8] sm:$0xff] %v543
        %552 = vst [vmem:[%s352 + $0x10] sm:$0xff] %v544
        %553 = vst [vmem:[%s352 + $0x18] sm:$0xff] %v545
        %v554 = vld [vmem:[%s3] sm:$0x7]
        %v555 = vld [vmem:[%s4] sm:$0x1f]
        %557 = vset.pattern.permute.xlu0 0
        %558 = vperm.xlu0 %557, %v555
        %v559 = vpop.permute.xlu0 %558
        %vm561 = vcmask 261120
        %v563 = vsel %vm561, %v554, 0
        %565 = vmatprep.subr.bf16.mxu0 0
        %566 = vmatpush1.bf16.msra.mxu0 0
        %567 = vmatprep.subr.bf16.mxu0 0
        %568 = vmatpush1.bf16.msra.mxu0 0
        %569 = vmatprep.subr.bf16.mxu0 0
        %570 = vmatpush1.bf16.msra.mxu0 0
        %571 = vmatprep.subr.bf16.mxu0 0
        %572 = vmatpush1.bf16.msra.mxu0 0
        %573 = vmatprep.subr.bf16.mxu0 0
        %574 = vmatpush1.bf16.msra.mxu0 0
        %575 = vmatprep.subr.bf16.mxu0 0
        %576 = vmatpush1.bf16.msra.mxu0 0
        %577 = vmatprep.subr.bf16.mxu0 %v529
        %578 = vmatpush1.bf16.msra.mxu0 %v528
        %579 = vmatprep.subr.bf16.mxu0 %v527
        %580 = vmatpush1.bf16.msra.mxu0 %v526
        %581 = vmatprep.subr.bf16.mxu0 0
        %582 = vmatpush2.bf16.msra.mxu0 0
        %583 = vmatprep.subr.bf16.mxu0 0
        %584 = vmatpush2.bf16.msra.mxu0 0
        %585 = vmatprep.subr.bf16.mxu0 0
        %586 = vmatpush2.bf16.msra.mxu0 0
        %587 = vmatprep.subr.bf16.mxu0 0
        %588 = vmatpush2.bf16.msra.mxu0 0
        %589 = vmatprep.subr.bf16.mxu0 0
        %590 = vmatpush2.bf16.msra.mxu0 0
        %591 = vmatprep.subr.bf16.mxu0 0
        %592 = vmatpush2.bf16.msra.mxu0 0
        %593 = vmatprep.subr.bf16.mxu0 0
        %594 = vmatpush2.bf16.msra.mxu0 0
        %595 = vmatprep.subr.bf16.mxu0 0
        %596 = vmatpush2.bf16.msra.mxu0 0
        %597 = vmatprep.mubr.bf16.mxu0 0
        %598 = vmatmul.mubr.bf16.gmra.mxu0 %v563
        %v599 = vpop.f32.mrf.mxu0
        %v600 = vadd.f32 %v559, %v599
        %v601 = vpop.f32.mrf.mxu0
        %v602 = vadd.f32 %v559, %v601
        %v603 = vpop.f32.mrf.mxu0
        %v604 = vpop.f32.mrf.mxu0
        %605 = vdwg.mxu0
        %v606 = vpack.c.bf16 %v600, %v600
        %v607 = vpack.c.bf16 %v602, %v602
        %v610 = vcombine.low %v606, %v607
        %v612 = vunpack.c.l.s4 1983009808
        %v613 = vunpack.c.0.s8 %v612
        %v614 = vlaneseq
        %v615 = vshrl.u32 %v614, 7
        %v616 = vsub.s32 %v613, %v615
        %v617 = vrot.slane %v610, %v616
        %619 = vst [vmem:[%s359] sm:$0xf] %v617
        %v620 = vunpack.c.l.bf16 %v403
        %v622 = vcombine.high %v620, %v620
        %v624 = vsub.f32 %v600, %v620
        %v625 = vsub.f32 %v602, %v622
        %v626 = vmul.f32 %v624, %v624
        %v627 = vmul.f32 %v625, %v625
        %vm628 = vcmask 1043456
        %v629 = vsel %vm628, %v626, 0.0
        %v630 = vrot.slane %v629, 4
        %v631 = vadd.f32 %v629, %v630
        %v632 = vrot.slane %v631, 2
        %v633 = vadd.f32 %v631, %v632
        %v634 = vrot.slane %v633, 1
        %v635 = vadd.f32 %v633, %v634
        %v636 = vsel %vm628, %v627, 0.0
        %v637 = vrot.slane %v636, 4
        %v638 = vadd.f32 %v636, %v637
        %v639 = vrot.slane %v638, 2
        %v640 = vadd.f32 %v638, %v639
        %v641 = vrot.slane %v640, 1
        %v642 = vadd.f32 %v640, %v641
        %v643 = vld [vmem:[%s366] sm:$0x3]
        %v646 = vcombine.low %v635, %v642
        %v648 = vunpack.c.l.s4 1966171168
        %v649 = vunpack.c.0.s8 %v648
        %v650 = vlaneseq
        %v651 = vshrl.u32 %v650, 7
        %v652 = vsub.s32 %v649, %v651
        %v653 = vrot.slane %v646, %v652
        %v655 = vunpack.c.l.s4 1966171168
        %v656 = vunpack.c.0.s8 %v655
        %v657 = vlaneseq
        %v658 = vshrl.u32 %v657, 7
        %v659 = vsub.s32 %v656, %v658
        %v660 = vrot.slane %v653, %v659
        %v662 = vadd.f32 %v643, %v660
        %v663 = vlaneseq
        %vm664 = vcmp.ge.s32.totalorder %v663, 0
        %vm665 = vcmp.lt.s32.totalorder %v663, 256
        %vm666 = vmand %vm664, %vm665
        %667 = vst.msk [vmem:[%s366] sm:$0x3] %vm666, %v662
        %v668 = vld [vmem:[%s373] sm:$0x3]
        %v671 = vcombine.high %v600, %v602
        %v673 = vunpack.c.l.s4 1966171168
        %v674 = vunpack.c.0.s8 %v673
        %v675 = vlaneseq
        %v676 = vshrl.u32 %v675, 7
        %v677 = vsub.s32 %v674, %v676
        %v678 = vrot.slane %v671, %v677
        %v680 = vunpack.c.l.s4 1966171168
        %v681 = vunpack.c.0.s8 %v680
        %v682 = vlaneseq
        %v683 = vshrl.u32 %v682, 7
        %v684 = vsub.s32 %v681, %v683
        %v685 = vrot.slane %v678, %v684
        %v687 = vadd.f32 %v668, %v685
        %688 = vst.msk [vmem:[%s373] sm:$0x3] %vm666, %v687
        %s689 = sand.u32 %s174, 1
        %s690 = scalar_lea.sflag [#allocation3], %s689
        %s691 = sand.u32 %s174, 1
        %s692 = smul.addr %s691, 32
        %s693 = scalar_lea.vmem [#allocation2], %s692
        %s694 = sand.u32 %s29, 1
        %s695 = scalar_lea.sflag [#allocation5], %s694
        %s696 = sand.u32 %s204, 1
        %s697 = smul.addr %s696, 4
        %s698 = scalar_lea.vmem [#allocation4], %s697
        %s699 = sand.u32 %s29, 1
        %s700 = scalar_lea.sflag [#allocation5], %s699
        %s701 = sand.u32 %s232, 1
        %s702 = smul.addr %s701, 2
        %s703 = scalar_lea.vmem [#allocation6], %s702
        %s704 = sand.u32 %s260, 1
        %s705 = scalar_lea.sflag [#allocation8], %s704
        %s706 = sand.u32 %s260, 1
        %s707 = smul.addr %s706, 2
        %s708 = scalar_lea.vmem [#allocation7], %s707
        // Predicated region
        $region45: #{tpu_custom_call.1} parent=39 // pred_check
          %p709 = pneg %p184
        $region46: #{tpu_custom_call.1} parent=39 // pred_check_branch
          %711 = sbr.rel (%p709) target = $region48
        $region47: #{tpu_custom_call.1} parent=39 // pred_region
          %s712 = sadd.s32 %s35, %s36
          %s713 = smul.u32 2, %s712
          %s715 = ssub.s32 512, 512
          %716 = vsyncadd %s690, %s715
          %s717 = smul.addr %s34, 8
          %s718 = sadd.s32 %s713, %s717
          %s719 = smul.addr %s718, 64
          %s720 = scalar_lea.hbm %s5, %s719
          %s721 = sshll.u32 %s693, 4
          %s722 = int_to_ptr.vmem [resolvable:$true] %s721
          %727 = dma.vmem_to_hbm [thread:$0]  %s722, 512, %s720, %s690, 128, 128, 8
        $region48: #{tpu_custom_call.1} parent=39 // pred_fallthru
          _
        // Predicated region
        $region49: #{tpu_custom_call.1} parent=39 // pred_check
          %p728 = pneg %p214
        $region50: #{tpu_custom_call.1} parent=39 // pred_check_branch
          %730 = sbr.rel (%p728) target = $region52
        $region51: #{tpu_custom_call.1} parent=39 // pred_region
          %s731 = sadd.s32 %s35, %s36
          %s732 = smul.u32 2, %s731
          %s734 = ssub.s32 64, 64
          %735 = vsyncadd %s695, %s734
          %s736 = smul.addr %s34, 2
          %s737 = sadd.s32 %s732, %s736
          %s738 = smul.addr %s737, 32
          %s739 = scalar_lea.hbm %s6, %s738
          %s741 = sshll.u32 %s698, 4
          %s742 = int_to_ptr.vmem [resolvable:$true] %s741
          %744 = dma.vmem_to_hbm [thread:$0]  %s742, 64, %s739, %s695
        $region52: #{tpu_custom_call.1} parent=39 // pred_fallthru
          _
        // Predicated region
        $region53: #{tpu_custom_call.1} parent=39 // pred_check
          %p745 = pneg %p242
        $region54: #{tpu_custom_call.1} parent=39 // pred_check_branch
          %747 = sbr.rel (%p745) target = $region56
        $region55: #{tpu_custom_call.1} parent=39 // pred_region
          %s748 = sadd.s32 %s34, %s35
          %s750 = ssub.s32 32, 32
          %751 = vsyncadd %s700, %s750
          %s752 = smul.addr %s748, 2
          %s753 = smul.addr %s752, 16
          %s754 = scalar_lea.hbm %s7, %s753
          %s756 = sshll.u32 %s703, 4
          %s757 = int_to_ptr.vmem [resolvable:$true] %s756
          %759 = dma.vmem_to_hbm [thread:$0]  %s757, 32, %s754, %s700
        $region56: #{tpu_custom_call.1} parent=39 // pred_fallthru
          _
        // Predicated region
        $region57: #{tpu_custom_call.1} parent=39 // pred_check
          %p760 = pneg %p270
        $region58: #{tpu_custom_call.1} parent=39 // pred_check_branch
          %762 = sbr.rel (%p760) target = $region60
        $region59: #{tpu_custom_call.1} parent=39 // pred_region
          %s763 = sadd.s32 %s34, %s35
          %s765 = ssub.s32 32, 32
          %766 = vsyncadd %s705, %s765
          %s767 = smul.addr %s763, 2
          %s768 = smul.addr %s767, 16
          %s769 = scalar_lea.hbm %s8, %s768
          %s771 = sshll.u32 %s708, 4
          %s772 = int_to_ptr.vmem [resolvable:$true] %s771
          %774 = dma.vmem_to_hbm [thread:$0]  %s772, 32, %s769, %s705
        $region60: #{tpu_custom_call.1} parent=39 // pred_fallthru
          _
      $region40: #{tpu_custom_call.1} parent=5 // pred_fallthru
        _
      %p775 = scmp.le.s32.totalorder 2, %s24
      // Predicated region
      $region61: #{tpu_custom_call.1} parent=5 // pred_check
        %p776 = pneg %p775
      $region62: #{tpu_custom_call.1} parent=5 // pred_check_branch
        %778 = sbr.rel (%p776) target = $region64
      $region63: #{tpu_custom_call.1} parent=5 // pred_region
        %s779 = ssub.s32 %s24, 2
        // Predicated region
        $region65: #{tpu_custom_call.1} parent=63 // pred_check
          %p780 = pneg %p190
        $region66: #{tpu_custom_call.1} parent=63 // pred_check_branch
          %782 = sbr.rel (%p780) target = $region68
        $region67: #{tpu_custom_call.1} parent=63 // pred_region
          %s783 = sand.u32 %s175, 1
          %s784 = scalar_lea.sflag [#allocation3], %s783
          %s785 = sand.u32 %s175, 1
          %s786 = smul.addr %s785, 32
          %s787 = scalar_lea.vmem [#allocation2], %s786
          %788 = dma.done %s784, 512
        $region68: #{tpu_custom_call.1} parent=63 // pred_fallthru
          _
        // Predicated region
        $region69: #{tpu_custom_call.1} parent=63 // pred_check
          %p789 = pneg %p220
        $region70: #{tpu_custom_call.1} parent=63 // pred_check_branch
          %791 = sbr.rel (%p789) target = $region72
        $region71: #{tpu_custom_call.1} parent=63 // pred_region
          %s792 = sand.u32 %s30, 1
          %s793 = scalar_lea.sflag [#allocation5], %s792
          %s794 = sand.u32 %s205, 1
          %s795 = smul.addr %s794, 4
          %s796 = scalar_lea.vmem [#allocation4], %s795
          %797 = dma.done %s793, 64
        $region72: #{tpu_custom_call.1} parent=63 // pred_fallthru
          _
        // Predicated region
        $region73: #{tpu_custom_call.1} parent=63 // pred_check
          %p798 = pneg %p248
        $region74: #{tpu_custom_call.1} parent=63 // pred_check_branch
          %800 = sbr.rel (%p798) target = $region76
        $region75: #{tpu_custom_call.1} parent=63 // pred_region
          %s801 = sand.u32 %s30, 1
          %s802 = scalar_lea.sflag [#allocation5], %s801
          %s803 = sand.u32 %s233, 1
          %s804 = smul.addr %s803, 2
          %s805 = scalar_lea.vmem [#allocation6], %s804
          %806 = dma.done %s802, 32
        $region76: #{tpu_custom_call.1} parent=63 // pred_fallthru
          _
        // Predicated region
        $region77: #{tpu_custom_call.1} parent=63 // pred_check
          %p807 = pneg %p276
        $region78: #{tpu_custom_call.1} parent=63 // pred_check_branch
          %809 = sbr.rel (%p807) target = $region80
        $region79: #{tpu_custom_call.1} parent=63 // pred_region
          %s810 = sand.u32 %s261, 1
          %s811 = scalar_lea.sflag [#allocation8], %s810
          %s812 = sand.u32 %s261, 1
          %s813 = smul.addr %s812, 2
          %s814 = scalar_lea.vmem [#allocation7], %s813
          %815 = dma.done %s811, 32
        $region80: #{tpu_custom_call.1} parent=63 // pred_fallthru
          _
      $region64: #{tpu_custom_call.1} parent=5 // pred_fallthru
        _
    $region6: #{tpu_custom_call.1} parent=1 // loop_footer
      %s28 = sadd.s32 1, %s24
    $region7: #{tpu_custom_call.1} parent=1 // loop_footer_branch
      %23 = sbr.rel target = $region3
    $region8: #{tpu_custom_call.1} parent=1 // loop_exit
      _
    %816 = vsyncpa [#allocation3], 1
    %s817 = scalar_lea.sflag [#allocation3], 1
    %818 = vsyncpa %s817, 1
    %819 = vsyncpa [#allocation5], 1
    %s820 = scalar_lea.sflag [#allocation5], 1
    %821 = vsyncpa %s820, 1
    %822 = vsyncpa [#allocation8], 1
    %s823 = scalar_lea.sflag [#allocation8], 1
    %824 = vsyncpa %s823, 1

</llo_original>
